<compile_context>
chip_gen: v5e
topology: v5e:2x2
jax: 0.10.0
libtpu: 0.0.40
codegen_flags: <defaults>
</compile_context>

<pallas_src>
import functools

import jax
import jax.numpy as jnp
from jax.experimental import pallas as pl
from jax.experimental.pallas import tpu as pltpu


def _shape_doubled_kernel(shape_ref, out_ref):
    """out[i] = shape[i] + shape[i] via scalar SMEM loads/stores."""
    ndim = out_ref.shape[0]          # static Python int
    for i in range(ndim):            # tiny static unroll (ndim <= a handful)
        s = shape_ref[i]
        out_ref[i] = s + s


@functools.lru_cache(maxsize=None)
def _build_call(ndim: int):
    """Memoized gridless pallas_call for a given rank."""
    return pl.pallas_call(
        _shape_doubled_kernel,
        out_shape=jax.ShapeDtypeStruct((ndim,), jnp.int32),
        in_specs=[pl.BlockSpec(memory_space=pltpu.SMEM)],
        out_specs=pl.BlockSpec(memory_space=pltpu.SMEM),
    )


def shape_as_tensor_doubled(x: jax.Array) -> jax.Array:
    """Equivalent of SimpleShapeAsTensorModel.forward(x)."""
    # x.shape is static metadata; pass it as a tiny int32 vector (no data from
    # x itself is read — exactly matching torch._shape_as_tensor semantics).
    shape_arr = jnp.asarray(x.shape, dtype=jnp.int32)
    return _build_call(x.ndim)(shape_arr)


if __name__ == "__main__":
    key = jax.random.PRNGKey(0)
    # Small NCHW input consistent with a typical conv-style tensor.
    x = jax.random.normal(key, (2, 4, 16, 16), dtype=jnp.float32)

    result = shape_as_tensor_doubled(x)
    jax.block_until_ready(result)

    expected = jnp.asarray(x.shape, dtype=jnp.int32) * 2
    assert result.shape == (x.ndim,), result.shape
    assert result.dtype == jnp.int32, result.dtype
    assert bool(jnp.all(result == expected)), (result, expected)

    print("KERNEL_OK")
</pallas_src>

<mosaic_0001>
module attributes {stable_mosaic.version = 11 : i64} {
  func.func @_shape_doubled_kernel(%arg0: memref<4xi32, #tpu.memory_space<smem>>, %arg1: memref<4xi32, #tpu.memory_space<smem>>) attributes {dimension_semantics = [], scalar_prefetch = 0 : i64, scratch_operands = 0 : i64, tpu.core_type = #tpu.core_type<tc>} {
    %c0 = arith.constant 0 : index
    %0 = memref.load %arg0[%c0] : memref<4xi32, #tpu.memory_space<smem>>
    %1 = arith.addi %0, %0 : i32
    %c0_0 = arith.constant 0 : index
    %2 = memref.load %arg1[%c0_0] : memref<4xi32, #tpu.memory_space<smem>>
    memref.store %1, %arg1[%c0_0] : memref<4xi32, #tpu.memory_space<smem>>
    %c1 = arith.constant 1 : index
    %3 = memref.load %arg0[%c1] : memref<4xi32, #tpu.memory_space<smem>>
    %4 = arith.addi %3, %3 : i32
    %c1_1 = arith.constant 1 : index
    %5 = memref.load %arg1[%c1_1] : memref<4xi32, #tpu.memory_space<smem>>
    memref.store %4, %arg1[%c1_1] : memref<4xi32, #tpu.memory_space<smem>>
    %c2 = arith.constant 2 : index
    %6 = memref.load %arg0[%c2] : memref<4xi32, #tpu.memory_space<smem>>
    %7 = arith.addi %6, %6 : i32
    %c2_2 = arith.constant 2 : index
    %8 = memref.load %arg1[%c2_2] : memref<4xi32, #tpu.memory_space<smem>>
    memref.store %7, %arg1[%c2_2] : memref<4xi32, #tpu.memory_space<smem>>
    %c3 = arith.constant 3 : index
    %9 = memref.load %arg0[%c3] : memref<4xi32, #tpu.memory_space<smem>>
    %10 = arith.addi %9, %9 : i32
    %c3_3 = arith.constant 3 : index
    %11 = memref.load %arg1[%c3_3] : memref<4xi32, #tpu.memory_space<smem>>
    memref.store %10, %arg1[%c3_3] : memref<4xi32, #tpu.memory_space<smem>>
    return
  }
}

</mosaic_0001>

<llo_original>
// kernel: tpu_custom_call.1
$region0: #{tpu_custom_call.1}
  #allocation0 [shape = 'u32[]', space=smem, size = 0x4, offset = 0x4, fixed_abs, tag = 'smem constant byte address 0x4 - core index']
  #allocation1 [shape = 'u32[72,128]{1,0:T(1,128)}', space=vmem, size = 0x9000, scoped, tag = 'internal scratch']
  %s0 = inlined_call_operand.hbm [shape: s32[4], index: 0, kind: input, shape index: {}]
  %s1 = inlined_call_operand.hbm [shape: s32[4], index: 1, kind: output, shape index: {}]
  %s2 = sld [smem:[#allocation0]]
  $region18: #{tpu_custom_call.1} parent=0
    _
  %s4 = ssub.s32 1, %s2
  %s5 = scalar_select 0, %s4, %s2
  $region1: #{tpu_custom_call.1} parent=0
    #allocation2 [shape = 'u8[512]{0}', space=smem, size = 0x200, scoped, tag = 'input window, operand 0, single buffered']
    #allocation3 [shape = 's32[1]{0}', space=sflag, size = 0x4, scoped, tag = 'scoped memory for tpu_custom_call.1']
    #allocation4 [shape = 's32[1]{0}', space=sflag, size = 0x4, scoped, tag = 'scoped memory for tpu_custom_call.1']
    #allocation5 [shape = 'u8[512]{0}', space=smem, size = 0x200, scoped, tag = 'output window, operand 0, single buffered']
    %6 = vsyncpa [#allocation3], 0
    %7 = vsyncpa [#allocation4], 0
    // Predicated region
    $region2: #{tpu_custom_call.1} parent=1 // pred_check
      _
    $region3: #{tpu_custom_call.1} parent=1 // pred_check_branch
      %9 = sbr.rel (0) target = $region5
    $region4: #{tpu_custom_call.1} parent=1 // pred_region
      %11 = vsyncadd [#allocation3], 0
      %s13 = sshll.u32 %s0, 4
      %s14 = int_to_ptr.hbm [resolvable:$true] %s13
      %16 = dma.hbm_to_smem %s14, 16, [#allocation2], [#allocation3]
    $region5: #{tpu_custom_call.1} parent=1 // pred_fallthru
      _
    // Predicated region
    $region6: #{tpu_custom_call.1} parent=1 // pred_check
      _
    $region7: #{tpu_custom_call.1} parent=1 // pred_check_branch
      %18 = sbr.rel (0) target = $region9
    $region8: #{tpu_custom_call.1} parent=1 // pred_region
      %20 = dma.done [#allocation3], 16
    $region9: #{tpu_custom_call.1} parent=1 // pred_fallthru
      _
    %21 = sfence
    %s22 = sld [smem:[#allocation2]]
    %s23 = sadd.s32 %s22, %s22
    %s24 = scalar_lea.smem [#allocation5], 0
    %25 = sst [smem:[%s24]] %s23
    %s26 = sld [smem:[#allocation2 + $0x1]]
    %s27 = sadd.s32 %s26, %s26
    %s28 = scalar_lea.smem [#allocation5], 1
    %29 = sst [smem:[%s28]] %s27
    %s30 = sld [smem:[#allocation2 + $0x2]]
    %s31 = sadd.s32 %s30, %s30
    %s32 = scalar_lea.smem [#allocation5], 2
    %33 = sst [smem:[%s32]] %s31
    %s34 = sld [smem:[#allocation2 + $0x3]]
    %s35 = sadd.s32 %s34, %s34
    %s36 = scalar_lea.smem [#allocation5], 3
    %37 = sst [smem:[%s36]] %s35
    // Predicated region
    $region10: #{tpu_custom_call.1} parent=1 // pred_check
      _
    $region11: #{tpu_custom_call.1} parent=1 // pred_check_branch
      %39 = sbr.rel (0) target = $region13
    $region12: #{tpu_custom_call.1} parent=1 // pred_region
      %41 = vsyncadd [#allocation4], 0
      %s43 = sshll.u32 %s1, 4
      %s44 = int_to_ptr.hbm [resolvable:$true] %s43
      %46 = dma.smem_to_hbm [#allocation5], 16, %s44, [#allocation4]
    $region13: #{tpu_custom_call.1} parent=1 // pred_fallthru
      _
    // Predicated region
    $region14: #{tpu_custom_call.1} parent=1 // pred_check
      _
    $region15: #{tpu_custom_call.1} parent=1 // pred_check_branch
      %48 = sbr.rel (0) target = $region17
    $region16: #{tpu_custom_call.1} parent=1 // pred_region
      %50 = dma.done [#allocation4], 16
    $region17: #{tpu_custom_call.1} parent=1 // pred_fallthru
      _
    %51 = sfence
    %52 = vsyncpa [#allocation3], 1
    %53 = vsyncpa [#allocation4], 1

</llo_original>
